<compile_context>
chip_gen: v7x
topology: tpu7x:2x2x1
jax: 0.10.0
libtpu: 0.0.40
codegen_flags: <defaults>
</compile_context>

<pallas_src>
import functools
import math

import jax
import jax.numpy as jnp
from jax.experimental import pallas as pl
from jax.experimental.pallas import tpu as pltpu


def _round_up(x: int, m: int) -> int:
    return ((x + m - 1) // m) * m


def _fused_mlp_kernel(*refs, n_layers: int):
    """Whole-MLP forward for one batch tile.

    refs = (x_ref, w1_ref, b1_ref, ..., wn_ref, bn_ref, o_ref).
    Hidden layers: tanh (EUP slot, effectively free); last layer: identity.
    Intermediates stay in vregs; accumulation is f32 on the MXU.
    """
    x_ref = refs[0]
    o_ref = refs[-1]

    h = x_ref[...]
    for i in range(n_layers):
        w = refs[1 + 2 * i][...]
        b = refs[2 + 2 * i][...]            # (1, d_out) broadcasts over rows
        h = jnp.dot(h, w, preferred_element_type=jnp.float32) + b
        if i < n_layers - 1:
            h = jnp.tanh(h)
    o_ref[...] = h.astype(o_ref.dtype)


def mlp_forward_pallas(x, params, *, block_batch: int = 512):
    """Single fused pallas_call for the whole MLP, tiled over the batch axis.

    x: (B, d_in); params: list of (w: (d_in_i, d_out_i), b: (1, d_out_i)).
    Weights/biases are tiny and use full-array VMEM blocks with constant
    index_maps (resident across grid steps); x / output are blocked on batch.
    """
    n_layers = len(params)
    B, d_in = x.shape
    d_out = params[-1][0].shape[1]

    # --- Lane-dense output: pad final layer out-features to a multiple of 128.
    d_out_pad = _round_up(d_out, 128)
    padded_params = list(params)
    if d_out_pad != d_out:
        w_last, b_last = params[-1]
        w_last = jnp.pad(w_last, ((0, 0), (0, d_out_pad - d_out)))
        b_last = jnp.pad(b_last, ((0, 0), (0, d_out_pad - d_out)))
        padded_params[-1] = (w_last, b_last)

    # --- Batch tiling: TB rows per grid step (>= VMEM-cheap, <= 512 target).
    tb = min(block_batch, _round_up(B, 8))
    b_pad = _round_up(B, tb)
    if b_pad != B:
        x = jnp.pad(x, ((0, b_pad - B), (0, 0)))   # padded rows are discarded
    n_blocks = b_pad // tb

    flat_inputs = [x]
    in_specs = [pl.BlockSpec((tb, d_in), lambda i: (i, 0))]
    for w, b in padded_params:
        flat_inputs.append(w)
        flat_inputs.append(b)
        in_specs.append(pl.BlockSpec(w.shape, lambda i: (0, 0)))
        in_specs.append(pl.BlockSpec(b.shape, lambda i: (0, 0)))
    out_specs = pl.BlockSpec((tb, d_out_pad), lambda i: (i, 0))

    # --- Advisory cost estimate for the XLA scheduler.
    flops = 0
    transcendentals = 0
    bytes_accessed = x.size * x.dtype.itemsize + b_pad * d_out_pad * 4
    for li, (w, b) in enumerate(padded_params):
        flops += 2 * b_pad * w.shape[0] * w.shape[1]
        bytes_accessed += (w.size + b.size) * 4
        if li < n_layers - 1:
            transcendentals += b_pad * w.shape[1]

    kernel = functools.partial(_fused_mlp_kernel, n_layers=n_layers)

    out = pl.pallas_call(
        kernel,
        out_shape=jax.ShapeDtypeStruct((b_pad, d_out_pad), x.dtype),
        grid_spec=pltpu.PrefetchScalarGridSpec(
            num_scalar_prefetch=0,
            grid=(n_blocks,),
            in_specs=in_specs,
            out_specs=out_specs,
        ),
        compiler_params=pltpu.CompilerParams(
            dimension_semantics=("parallel",),
        ),
        cost_estimate=pl.CostEstimate(
            flops=int(flops),
            transcendentals=int(transcendentals),
            bytes_accessed=int(bytes_accessed),
        ),
    )(*flat_inputs)

    return out[:B, :d_out]


class MLPPallas:
    """Mirror of the PyTorch MLP: Linear layers with Tanh between hidden layers
    and Identity as the output activation, fused into one Pallas kernel."""

    def __init__(self, layer_sizes, key):
        self.layer_sizes = list(layer_sizes)
        self.params = []
        for i in range(len(layer_sizes) - 1):
            fan_in, fan_out = layer_sizes[i], layer_sizes[i + 1]
            key, kw, kb = jax.random.split(key, 3)
            # PyTorch nn.Linear default init: U(-1/sqrt(fan_in), 1/sqrt(fan_in))
            bound = 1.0 / math.sqrt(fan_in)
            w = jax.random.uniform(kw, (fan_out, fan_in), jnp.float32, -bound, bound)
            b = jax.random.uniform(kb, (fan_out,), jnp.float32, -bound, bound)
            # pre-transpose weight to (fan_in, fan_out); bias to (1, fan_out)
            self.params.append((w.T, b.reshape(1, -1)))

    def __call__(self, x):
        return mlp_forward_pallas(x, self.params)

    def reference(self, x):
        """Pure-JAX reference for correctness checking."""
        n_layers = len(self.params)
        h = x
        for i, (w, b) in enumerate(self.params):
            h = h @ w + b
            if i < n_layers - 1:
                h = jnp.tanh(h)
        return h


if __name__ == "__main__":
    key = jax.random.PRNGKey(0)
    key, k_param, k_x1, k_x2 = jax.random.split(key, 4)

    # CartPole-style policy net: obs_dim=4 -> hidden=32 -> n_actions=2
    layer_sizes = [4, 32, 2]
    mlp = MLPPallas(layer_sizes, k_param)

    # Small batch (single grid step).
    batch = 8
    x = jax.random.normal(k_x1, (batch, layer_sizes[0]), jnp.float32)
    out = mlp(x)
    jax.block_until_ready(out)
    ref = mlp.reference(x)
    assert out.shape == (batch, layer_sizes[-1])
    assert jnp.allclose(out, ref, atol=1e-5, rtol=1e-5), "mismatch vs JAX reference (B=8)"

    # Larger batch exercising the batch grid + non-divisible padding path.
    batch2 = 1040  # -> padded to 3 x 512-row tiles
    x2 = jax.random.normal(k_x2, (batch2, layer_sizes[0]), jnp.float32)
    out2 = mlp(x2)
    jax.block_until_ready(out2)
    ref2 = mlp.reference(x2)
    assert out2.shape == (batch2, layer_sizes[-1])
    assert jnp.allclose(out2, ref2, atol=1e-5, rtol=1e-5), "mismatch vs JAX reference (B=1040)"

    print("KERNEL_OK")
</pallas_src>

<mosaic_0001>
module attributes {stable_mosaic.version = 11 : i64} {
  func.func @_fused_mlp_kernel(%arg0: i32, %arg1: memref<8x4xf32, #tpu.memory_space<vmem>>, %arg2: memref<4x32xf32, #tpu.memory_space<vmem>>, %arg3: memref<1x32xf32, #tpu.memory_space<vmem>>, %arg4: memref<32x128xf32, #tpu.memory_space<vmem>>, %arg5: memref<1x128xf32, #tpu.memory_space<vmem>>, %arg6: memref<8x128xf32, #tpu.memory_space<vmem>>) attributes {dimension_semantics = [#tpu.dimension_semantics<parallel>], iteration_bounds = array<i64: 1>, scalar_prefetch = 0 : i64, scratch_operands = 0 : i64, tpu.core_type = #tpu.core_type<tc>, window_params = [{transform_indices = @transform_0, window_bounds = array<i64: 8, 4>}, {pipeline_mode = #tpu.pipeline_mode<synchronous>, transform_indices = @transform_1, window_bounds = array<i64: 4, 32>}, {pipeline_mode = #tpu.pipeline_mode<synchronous>, transform_indices = @transform_2, window_bounds = array<i64: 1, 32>}, {pipeline_mode = #tpu.pipeline_mode<synchronous>, transform_indices = @transform_3, window_bounds = array<i64: 32, 128>}, {pipeline_mode = #tpu.pipeline_mode<synchronous>, transform_indices = @transform_4, window_bounds = array<i64: 1, 128>}, {transform_indices = @transform_5, window_bounds = array<i64: 8, 128>}]} {
    %c0 = arith.constant 0 : index
    %c0_0 = arith.constant 0 : index
    %0 = vector.load %arg1[%c0, %c0_0] : memref<8x4xf32, #tpu.memory_space<vmem>>, vector<8x4xf32>
    %c0_1 = arith.constant 0 : index
    %c0_2 = arith.constant 0 : index
    %1 = vector.load %arg2[%c0_1, %c0_2] : memref<4x32xf32, #tpu.memory_space<vmem>>, vector<4x32xf32>
    %c0_3 = arith.constant 0 : index
    %c0_4 = arith.constant 0 : index
    %2 = vector.load %arg3[%c0_3, %c0_4] : memref<1x32xf32, #tpu.memory_space<vmem>>, vector<1x32xf32>
    %cst = arith.constant dense<0.000000e+00> : vector<8x32xf32>
    %3 = tpu.matmul %0, %1, %cst {dimension_numbers = #tpu.dot_dimension_numbers<[1], [0], [0], [1], [0, 0, 1, 1], [], []>} : vector<8x4xf32>, vector<4x32xf32>, vector<8x32xf32> -> vector<8x32xf32>
    %4 = vector.broadcast %2 : vector<1x32xf32> to vector<8x32xf32>
    %5 = arith.addf %3, %4 : vector<8x32xf32>
    %6 = math.tanh %5 : vector<8x32xf32>
    %c0_5 = arith.constant 0 : index
    %c0_6 = arith.constant 0 : index
    %7 = vector.load %arg4[%c0_5, %c0_6] : memref<32x128xf32, #tpu.memory_space<vmem>>, vector<32x128xf32>
    %c0_7 = arith.constant 0 : index
    %c0_8 = arith.constant 0 : index
    %8 = vector.load %arg5[%c0_7, %c0_8] : memref<1x128xf32, #tpu.memory_space<vmem>>, vector<1x128xf32>
    %cst_9 = arith.constant dense<0.000000e+00> : vector<8x128xf32>
    %9 = tpu.matmul %6, %7, %cst_9 {dimension_numbers = #tpu.dot_dimension_numbers<[1], [0], [0], [1], [0, 0, 1, 1], [], []>} : vector<8x32xf32>, vector<32x128xf32>, vector<8x128xf32> -> vector<8x128xf32>
    %10 = vector.broadcast %8 : vector<1x128xf32> to vector<8x128xf32>
    %11 = arith.addf %9, %10 : vector<8x128xf32>
    %c0_10 = arith.constant 0 : index
    %c0_11 = arith.constant 0 : index
    %12 = vector.load %arg6[%c0_10, %c0_11] : memref<8x128xf32, #tpu.memory_space<vmem>>, vector<8x128xf32>
    tpu.vector_store %arg6[%c0_10, %c0_11], %11 {strides = array<i32>} : memref<8x128xf32, #tpu.memory_space<vmem>>, vector<8x128xf32>,
    return
  }
  func.func @transform_0(%arg0: i32) -> (i32, i32) {
    %c0_i32 = arith.constant 0 : i32
    %c0_i32_0 = arith.constant 0 : i32
    return %arg0, %c0_i32 : i32, i32
  }
  func.func @transform_1(%arg0: i32) -> (i32, i32) {
    %c0_i32 = arith.constant 0 : i32
    %c0_i32_0 = arith.constant 0 : i32
    %c0_i32_1 = arith.constant 0 : i32
    return %c0_i32, %c0_i32_0 : i32, i32
  }
  func.func @transform_2(%arg0: i32) -> (i32, i32) {
    %c0_i32 = arith.constant 0 : i32
    %c0_i32_0 = arith.constant 0 : i32
    %c0_i32_1 = arith.constant 0 : i32
    return %c0_i32, %c0_i32_0 : i32, i32
  }
  func.func @transform_3(%arg0: i32) -> (i32, i32) {
    %c0_i32 = arith.constant 0 : i32
    %c0_i32_0 = arith.constant 0 : i32
    %c0_i32_1 = arith.constant 0 : i32
    return %c0_i32, %c0_i32_0 : i32, i32
  }
  func.func @transform_4(%arg0: i32) -> (i32, i32) {
    %c0_i32 = arith.constant 0 : i32
    %c0_i32_0 = arith.constant 0 : i32
    %c0_i32_1 = arith.constant 0 : i32
    return %c0_i32, %c0_i32_0 : i32, i32
  }
  func.func @transform_5(%arg0: i32) -> (i32, i32) {
    %c0_i32 = arith.constant 0 : i32
    %c0_i32_0 = arith.constant 0 : i32
    return %arg0, %c0_i32 : i32, i32
  }
}

</mosaic_0001>

<llo_original>
// kernel: tpu_custom_call.1
$region0: #{tpu_custom_call.1}
  #allocation0 [shape = 'u32[]', space=smem, size = 0x4, offset = 0x4, fixed_abs, tag = 'smem constant byte address 0x4 - core index']
  #allocation1 [shape = 'u32[144,128]{1,0:T(1,128)}', space=vmem, size = 0x12000, scoped, tag = 'internal scratch']
  %s0 = inlined_call_operand.vmem [shape: f32[8,4], index: 0, kind: input, shape index: {}]
  %s1 = inlined_call_operand.vmem [shape: f32[4,32], index: 1, kind: input, shape index: {}]
  %s2 = inlined_call_operand.vmem [shape: f32[1,32], index: 2, kind: input, shape index: {}]
  %s3 = inlined_call_operand.hbm [shape: f32[32,128], index: 3, kind: input, shape index: {}]
  %s4 = inlined_call_operand.vmem [shape: f32[1,128], index: 4, kind: input, shape index: {}]
  %s5 = inlined_call_operand.hbm [shape: f32[8,128], index: 5, kind: output, shape index: {}]
  %s6 = sld [smem:[#allocation0]]
  $region34: #{tpu_custom_call.1} parent=0
    _
  %s8 = ssub.s32 1, %s6
  %s9 = scalar_select 0, %s8, %s6
  $region1: #{tpu_custom_call.1} parent=0
    #allocation2 [shape = 'u8[16384]{0}', space=vmem, size = 0x4000, scoped, tag = 'input window, operand 3, single buffered']
    #allocation3 [shape = 's32[1]{0}', space=sflag, size = 0x4, scoped, tag = 'scoped memory for tpu_custom_call.1']
    #allocation4 [shape = 's32[1]{0}', space=sflag, size = 0x4, scoped, tag = 'scoped memory for tpu_custom_call.1']
    #allocation5 [shape = 'u8[4096]{0}', space=vmem, size = 0x1000, scoped, tag = 'output window, operand 0, single buffered']
    %10 = vsyncpa [#allocation3], 0
    %11 = vsyncpa [#allocation4], 0
    // Predicated region
    $region2: #{tpu_custom_call.1} parent=1 // pred_check
      _
    $region3: #{tpu_custom_call.1} parent=1 // pred_check_branch
      %13 = sbr.rel (0) target = $region5
    $region4: #{tpu_custom_call.1} parent=1 // pred_region
      _
    $region5: #{tpu_custom_call.1} parent=1 // pred_fallthru
      _
    // Predicated region
    $region6: #{tpu_custom_call.1} parent=1 // pred_check
      _
    $region7: #{tpu_custom_call.1} parent=1 // pred_check_branch
      %15 = sbr.rel (0) target = $region9
    $region8: #{tpu_custom_call.1} parent=1 // pred_region
      _
    $region9: #{tpu_custom_call.1} parent=1 // pred_fallthru
      _
    // Predicated region
    $region10: #{tpu_custom_call.1} parent=1 // pred_check
      _
    $region11: #{tpu_custom_call.1} parent=1 // pred_check_branch
      %17 = sbr.rel (0) target = $region13
    $region12: #{tpu_custom_call.1} parent=1 // pred_region
      _
    $region13: #{tpu_custom_call.1} parent=1 // pred_fallthru
      _
    // Predicated region
    $region14: #{tpu_custom_call.1} parent=1 // pred_check
      _
    $region15: #{tpu_custom_call.1} parent=1 // pred_check_branch
      %19 = sbr.rel (0) target = $region17
    $region16: #{tpu_custom_call.1} parent=1 // pred_region
      %s21 = ssub.s32 512, 512
      %22 = vsyncadd [#allocation3], %s21
      %s23 = sshll.u32 [#allocation2], 4
      %s24 = int_to_ptr.vmem [resolvable:$true] %s23
      %29 = dma.hbm_to_vmem [thread:$0]  %s3, 512, %s24, [#allocation3], 128, 128, 8
    $region17: #{tpu_custom_call.1} parent=1 // pred_fallthru
      _
    // Predicated region
    $region18: #{tpu_custom_call.1} parent=1 // pred_check
      _
    $region19: #{tpu_custom_call.1} parent=1 // pred_check_branch
      %31 = sbr.rel (0) target = $region21
    $region20: #{tpu_custom_call.1} parent=1 // pred_region
      _
    $region21: #{tpu_custom_call.1} parent=1 // pred_fallthru
      _
    // Predicated region
    $region22: #{tpu_custom_call.1} parent=1 // pred_check
      _
    $region23: #{tpu_custom_call.1} parent=1 // pred_check_branch
      %33 = sbr.rel (0) target = $region25
    $region24: #{tpu_custom_call.1} parent=1 // pred_region
      %34 = dma.done [#allocation3], 512
    $region25: #{tpu_custom_call.1} parent=1 // pred_fallthru
      _
    %v35 = vld [vmem:[%s0] sm:$0xff]
    %v36 = vld [vmem:[%s1] sm:$0xf]
    %v37 = vld [vmem:[%s2] sm:$0x1]
    %v39 = vlaneseq
    %v40 = vshrl.u32 %v39, 7
    %v41 = vsub.s32 0, %v40
    %v42 = vrot.slane %v37, %v41
    %vm44 = vcmask 31744
    %v46 = vsel %vm44, %v35, 0
    %vm48 = vcmask 1043456
    %v50 = vsel %vm48, %v36, 0
    %52 = vmatprep.subr.mxu0 0.0
    %53 = vmatpush1.msra.mxu0 %v50
    %54 = vmatprep.subr.mxu0 0.0
    %55 = vmatpush1.msra.mxu0 0.0
    %56 = vmatprep.subr.mxu0 0.0
    %57 = vmatpush1.msra.mxu0 0.0
    %58 = vmatprep.subr.mxu0 0.0
    %59 = vmatpush1.msra.mxu0 0.0
    %60 = vmatprep.subr.mxu0 0.0
    %61 = vmatpush1.msra.mxu0 0.0
    %62 = vmatprep.subr.mxu0 0.0
    %63 = vmatpush1.msra.mxu0 0.0
    %64 = vmatprep.subr.mxu0 0.0
    %65 = vmatpush1.msra.mxu0 0.0
    %66 = vmatprep.subr.mxu0 0.0
    %67 = vmatpush1.msra.mxu0 0.0
    %68 = vmatprep.subr.mxu0 0.0
    %69 = vmatpush1.msra.mxu0 0.0
    %70 = vmatprep.subr.mxu0 0.0
    %71 = vmatpush1.msra.mxu0 0.0
    %72 = vmatprep.subr.mxu0 0.0
    %73 = vmatpush1.msra.mxu0 0.0
    %74 = vmatprep.subr.mxu0 0.0
    %75 = vmatpush1.msra.mxu0 0.0
    %76 = vmatprep.subr.mxu0 0.0
    %77 = vmatpush1.msra.mxu0 0.0
    %78 = vmatprep.subr.mxu0 0.0
    %79 = vmatpush1.msra.mxu0 0.0
    %80 = vmatprep.subr.mxu0 0.0
    %81 = vmatpush1.msra.mxu0 0.0
    %82 = vmatprep.subr.mxu0 0.0
    %83 = vmatpush1.msra.mxu0 0.0
    %84 = vmatprep.subr.mxu0 0.0
    %85 = vmatpush1.msra.mxu0 0.0
    %86 = vmatprep.subr.mxu0 0.0
    %87 = vmatpush1.msra.mxu0 0.0
    %88 = vmatprep.subr.mxu0 0.0
    %89 = vmatpush1.msra.mxu0 0.0
    %90 = vmatprep.subr.mxu0 0.0
    %91 = vmatpush1.msra.mxu0 0.0
    %92 = vmatprep.subr.mxu0 0.0
    %93 = vmatpush1.msra.mxu0 0.0
    %94 = vmatprep.subr.mxu0 0.0
    %95 = vmatpush1.msra.mxu0 0.0
    %96 = vmatprep.subr.mxu0 0.0
    %97 = vmatpush1.msra.mxu0 0.0
    %98 = vmatprep.subr.mxu0 0.0
    %99 = vmatpush1.msra.mxu0 0.0
    %100 = vmatprep.subr.mxu0 0.0
    %101 = vmatpush1.msra.mxu0 0.0
    %102 = vmatprep.subr.mxu0 0.0
    %103 = vmatpush1.msra.mxu0 0.0
    %104 = vmatprep.subr.mxu0 0.0
    %105 = vmatpush1.msra.mxu0 0.0
    %106 = vmatprep.subr.mxu0 0.0
    %107 = vmatpush1.msra.mxu0 0.0
    %108 = vmatprep.subr.mxu0 0.0
    %109 = vmatpush1.msra.mxu0 0.0
    %110 = vmatprep.subr.mxu0 0.0
    %111 = vmatpush1.msra.mxu0 0.0
    %112 = vmatprep.subr.mxu0 0.0
    %113 = vmatpush1.msra.mxu0 0.0
    %114 = vmatprep.subr.mxu0 0.0
    %115 = vmatpush1.msra.mxu0 0.0
    %116 = vmatprep.mubr.f32.mxu0 0.0
    %117 = vmatmul.mubr.f32.gmra.mrb[0].mxu0 %v46
    %v118 = vpop.f32.mrb[0].mxu0
    %v119 = vadd.f32 %v42, %v118
    %v120 = vpop.f32.mrb[0].mxu0
    %121 = vdwg.mxu0
    %v122 = vtanh.pop %v119
    %v123 = vld [vmem:[#allocation2] sm:$0xff]
    %v124 = vld [vmem:[#allocation2 + $0x8] sm:$0xff]
    %v125 = vld [vmem:[#allocation2 + $0x10] sm:$0xff]
    %v126 = vld [vmem:[#allocation2 + $0x18] sm:$0xff]
    %v127 = vld [vmem:[%s4] sm:$0x1]
    %v129 = vlaneseq
    %v130 = vshrl.u32 %v129, 7
    %v131 = vsub.s32 0, %v130
    %v132 = vrot.slane %v127, %v131
    %vm134 = vcmask 261120
    %v136 = vsel %vm134, %v122, 0
    %138 = vmatprep.subr.mxu0 0.0
    %139 = vmatpush1.msra.mxu0 %v123
    %140 = vmatprep.subr.mxu0 0.0
    %141 = vmatpush1.msra.mxu0 %v124
    %142 = vmatprep.subr.mxu0 0.0
    %143 = vmatpush1.msra.mxu0 %v125
    %144 = vmatprep.subr.mxu0 0.0
    %145 = vmatpush1.msra.mxu0 %v126
    %146 = vmatprep.subr.mxu0 0.0
    %147 = vmatpush1.msra.mxu0 0.0
    %148 = vmatprep.subr.mxu0 0.0
    %149 = vmatpush1.msra.mxu0 0.0
    %150 = vmatprep.subr.mxu0 0.0
    %151 = vmatpush1.msra.mxu0 0.0
    %152 = vmatprep.subr.mxu0 0.0
    %153 = vmatpush1.msra.mxu0 0.0
    %154 = vmatprep.subr.mxu0 0.0
    %155 = vmatpush1.msra.mxu0 0.0
    %156 = vmatprep.subr.mxu0 0.0
    %157 = vmatpush1.msra.mxu0 0.0
    %158 = vmatprep.subr.mxu0 0.0
    %159 = vmatpush1.msra.mxu0 0.0
    %160 = vmatprep.subr.mxu0 0.0
    %161 = vmatpush1.msra.mxu0 0.0
    %162 = vmatprep.subr.mxu0 0.0
    %163 = vmatpush1.msra.mxu0 0.0
    %164 = vmatprep.subr.mxu0 0.0
    %165 = vmatpush1.msra.mxu0 0.0
    %166 = vmatprep.subr.mxu0 0.0
    %167 = vmatpush1.msra.mxu0 0.0
    %168 = vmatprep.subr.mxu0 0.0
    %169 = vmatpush1.msra.mxu0 0.0
    %170 = vmatprep.subr.mxu0 0.0
    %171 = vmatpush1.msra.mxu0 0.0
    %172 = vmatprep.subr.mxu0 0.0
    %173 = vmatpush1.msra.mxu0 0.0
    %174 = vmatprep.subr.mxu0 0.0
    %175 = vmatpush1.msra.mxu0 0.0
    %176 = vmatprep.subr.mxu0 0.0
    %177 = vmatpush1.msra.mxu0 0.0
    %178 = vmatprep.subr.mxu0 0.0
    %179 = vmatpush1.msra.mxu0 0.0
    %180 = vmatprep.subr.mxu0 0.0
    %181 = vmatpush1.msra.mxu0 0.0
    %182 = vmatprep.subr.mxu0 0.0
    %183 = vmatpush1.msra.mxu0 0.0
    %184 = vmatprep.subr.mxu0 0.0
    %185 = vmatpush1.msra.mxu0 0.0
    %186 = vmatprep.subr.mxu0 0.0
    %187 = vmatpush1.msra.mxu0 0.0
    %188 = vmatprep.subr.mxu0 0.0
    %189 = vmatpush1.msra.mxu0 0.0
    %190 = vmatprep.subr.mxu0 0.0
    %191 = vmatpush1.msra.mxu0 0.0
    %192 = vmatprep.subr.mxu0 0.0
    %193 = vmatpush1.msra.mxu0 0.0
    %194 = vmatprep.subr.mxu0 0.0
    %195 = vmatpush1.msra.mxu0 0.0
    %196 = vmatprep.subr.mxu0 0.0
    %197 = vmatpush1.msra.mxu0 0.0
    %198 = vmatprep.subr.mxu0 0.0
    %199 = vmatpush1.msra.mxu0 0.0
    %200 = vmatprep.subr.mxu0 0.0
    %201 = vmatpush1.msra.mxu0 0.0
    %202 = vmatprep.mubr.f32.mxu0 0.0
    %203 = vmatmul.mubr.f32.gmra.mrb[0].mxu0 %v136
    %v204 = vpop.f32.mrb[0].mxu0
    %v205 = vadd.f32 %v132, %v204
    %v206 = vpop.f32.mrb[0].mxu0
    %207 = vdwg.mxu0
    %208 = vst [vmem:[#allocation5] sm:$0xff] %v205
    // Predicated region
    $region26: #{tpu_custom_call.1} parent=1 // pred_check
      _
    $region27: #{tpu_custom_call.1} parent=1 // pred_check_branch
      %210 = sbr.rel (0) target = $region29
    $region28: #{tpu_custom_call.1} parent=1 // pred_region
      %s212 = ssub.s32 128, 128
      %213 = vsyncadd [#allocation4], %s212
      %s215 = sshll.u32 [#allocation5], 4
      %s216 = int_to_ptr.vmem [resolvable:$true] %s215
      %218 = dma.vmem_to_hbm [thread:$0]  %s216, 128, %s5, [#allocation4]
    $region29: #{tpu_custom_call.1} parent=1 // pred_fallthru
      _
    // Predicated region
    $region30: #{tpu_custom_call.1} parent=1 // pred_check
      _
    $region31: #{tpu_custom_call.1} parent=1 // pred_check_branch
      %220 = sbr.rel (0) target = $region33
    $region32: #{tpu_custom_call.1} parent=1 // pred_region
      %221 = dma.done [#allocation4], 128
    $region33: #{tpu_custom_call.1} parent=1 // pred_fallthru
      _
    %222 = vsyncpa [#allocation3], 1
    %223 = vsyncpa [#allocation4], 1

</llo_original>
